<compile_context>
chip_gen: v7x
topology: tpu7x:2x2x1
jax: 0.10.0
libtpu: 0.0.40
codegen_flags: <defaults>
</compile_context>

<pallas_src>
import functools
import math

import jax
import jax.numpy as jnp
import numpy as np
from jax.experimental import pallas as pl
from jax.experimental.pallas import tpu as pltpu


# ----------------------------- kernel helpers -----------------------------

def _pw_conv1x1(rows, w_t):
    """1x1 conv as Ci broadcast-FMAs on the VPU (no MXU at these channel counts).

    rows: list of (1, HW) input-channel rows of ONE image, in channel order
          (this folds the GhostModule concat into the conv for free).
    w_t:  (Co, Ci) transposed weight with the BN scale already folded in.
    Returns (Co, HW).
    """
    acc = None
    for ci, row in enumerate(rows):
        term = w_t[:, ci:ci + 1] * row
        acc = term if acc is None else acc + term
    return acc


def _dwconv3x3(x, wd, b, relu, masks, img_w):
    """Batched 3x3 depthwise conv, stride 1, SAME, + folded-BN bias (+ ReLU).

    x:     (R, HW) rows = (image, channel) pairs, flattened spatial on lanes.
    wd:    (R, 9) per-row tap weights (BN scale folded in); b: (R, 1) bias.
    masks: (9, HW) precomputed {0,1} SAME-padding validity masks.
    Each off-center tap is a lane-axis rotate (XLU slot) times a mask -- no
    per-tap iota/compare/select, no sublane-axis rolls, rows never mix.
    """
    hw = x.shape[-1]
    lane_axis = x.ndim - 1                         # pltpu.roll needs axis >= 0
    acc = x * wd[:, 4:5]                           # center tap: no shift, no mask
    for t in range(9):
        if t == 4:
            continue
        dh, dw = t // 3 - 1, t % 3 - 1
        shift = (-(dh * img_w + dw)) % hw          # result[p] = x[p + dh*W + dw]
        tap = pltpu.roll(x, shift, axis=lane_axis)
        acc = acc + (tap * masks[t:t + 1, :]) * wd[:, t:t + 1]
    y = acc + b
    return jnp.maximum(y, 0.0) if relu else y


# ------------------------------- the kernel -------------------------------

def ghost_bottleneck_kernel(x_ref, masks_ref, p1_ref, p2_ref, o_ref, *,
                            bt, in_chs, mid_chs, out_chs, c1i, c2i, img_w):
    x = x_ref[...].astype(jnp.float32)             # (bt*in_chs, HW), lane-dense
    masks = masks_ref[...]                         # (9, HW)

    # ghost1 slab: [w1p^T*s1p | w1d*s1d | b1p | b1d], tiled bt times on rows
    p1 = p1_ref[...]
    w1pT = p1[:c1i, :in_chs]
    w1d = p1[:, in_chs:in_chs + 9]
    b1p = p1[:, in_chs + 9:in_chs + 10]
    b1d = p1[:, in_chs + 10:in_chs + 11]

    # ghost2 slab: [w2p^T*s2p | w2d*s2d | b2p | b2d], tiled bt times on rows
    p2 = p2_ref[...]
    w2pT = p2[:c2i, :mid_chs]
    w2d = p2[:, mid_chs:mid_chs + 9]
    b2p = p2[:, mid_chs + 9:mid_chs + 10]
    b2d = p2[:, mid_chs + 10:mid_chs + 11]

    rem1 = mid_chs - c1i
    rem2 = out_chs - c2i

    # ---- ghost1 primary 1x1 conv (per image), then batched bias + ReLU ----
    x1a_parts = []
    for b in range(bt):
        base = b * in_chs
        rows = [x[base + ci:base + ci + 1, :] for ci in range(in_chs)]
        x1a_parts.append(_pw_conv1x1(rows, w1pT))
    x1a = x1a_parts[0] if bt == 1 else jnp.concatenate(x1a_parts, axis=0)
    x1a = jnp.maximum(x1a + b1p, 0.0)                        # (bt*c1i, HW)

    # ---- ghost1 cheap op: batched 3x3 depthwise + ReLU ----
    x1b = _dwconv3x3(x1a, w1d, b1d, True, masks, img_w)      # (bt*c1i, HW)

    # ---- ghost2 primary 1x1 conv over concat([x1a, x1b])[:mid_chs] ----
    x2a_parts = []
    for b in range(bt):
        base = b * c1i
        rows = [x1a[base + ci:base + ci + 1, :] for ci in range(c1i)]
        rows += [x1b[base + ci:base + ci + 1, :] for ci in range(rem1)]
        x2a_parts.append(_pw_conv1x1(rows, w2pT))
    x2a = x2a_parts[0] if bt == 1 else jnp.concatenate(x2a_parts, axis=0)
    x2a = x2a + b2p                                          # no ReLU in ghost2

    # ---- ghost2 cheap op: batched 3x3 depthwise, no ReLU ----
    x2b = _dwconv3x3(x2a, w2d, b2d, False, masks, img_w)     # (bt*c2i, HW)

    # ---- concat[:out_chs] + identity residual via sliced lane-dense stores ----
    for b in range(bt):
        xo = b * out_chs
        xi = b * in_chs
        o_ref[xo:xo + c2i, :] = (
            x2a[b * c2i:b * c2i + c2i] + x[xi:xi + c2i]).astype(o_ref.dtype)
        if rem2 > 0:
            o_ref[xo + c2i:xo + out_chs, :] = (
                x2b[b * c2i:b * c2i + rem2]
                + x[xi + c2i:xi + out_chs]).astype(o_ref.dtype)


# ------------------------------ JAX wrapper ------------------------------

def _make_tap_masks(H, W):
    """Precomputed {0,1} SAME-padding validity masks, one per 3x3 tap."""
    hh = np.arange(H * W) // W
    ww = np.arange(H * W) % W
    m = np.zeros((9, H * W), np.float32)
    for t in range(9):
        dh, dw = t // 3 - 1, t % 3 - 1
        m[t] = ((hh + dh >= 0) & (hh + dh < H) &
                (ww + dw >= 0) & (ww + dw < W)).astype(np.float32)
    return jnp.asarray(m)


def _pack_params(p, bt):
    """Pack each ghost module into one BN-folded (bt*C_init, K) slab."""
    def pack(wp, wd, sp, bp, sd, bd):
        wpT = (wp * sp).T            # (Co, Ci): BN scale folded into 1x1 weight
        wdT = (wd * sd).T            # (Co, 9):  BN scale folded into dw weight
        slab = jnp.concatenate([wpT, wdT, bp.T, bd.T], axis=1).astype(jnp.float32)
        return jnp.tile(slab, (bt, 1))
    return (pack(p["w1p"], p["w1d"], p["s1p"], p["b1p"], p["s1d"], p["b1d"]),
            pack(p["w2p"], p["w2d"], p["s2p"], p["b2p"], p["s2d"], p["b2d"]))


def ghost_bottleneck(x_nchw, params):
    N, in_chs, H, W = x_nchw.shape
    mid_chs, out_chs = params["mid_chs"], params["out_chs"]
    assert in_chs == out_chs, "identity shortcut requires in_chs == out_chs"
    HW = H * W
    c1i = math.ceil(mid_chs / 2)
    c2i = math.ceil(out_chs / 2)

    # Images per grid step: fill the 8 f32 sublanes of a vreg and amortize the
    # per-step pipeline overhead / tiny DMAs.  Falls back to the full batch if
    # the block would not satisfy the sublane-divisibility rule.
    bt = max(1, min(N, max(1, 8 // in_chs)))
    while bt > 1 and N % bt != 0:
        bt -= 1
    if (bt * in_chs) % 8 != 0 and bt != N:
        bt = N                                    # block == full dim is always legal

    # NCHW -> (N*C, H*W): channels on sublanes, lane-dense spatial on lanes.
    # Pure reshape -- no wrapper transpose in this layout.
    x = x_nchw.reshape(N * in_chs, HW)
    masks = _make_tap_masks(H, W)
    pack1, pack2 = _pack_params(params, bt)

    kern = functools.partial(ghost_bottleneck_kernel, bt=bt, in_chs=in_chs,
                             mid_chs=mid_chs, out_chs=out_chs,
                             c1i=c1i, c2i=c2i, img_w=W)

    out = pl.pallas_call(
        kern,
        out_shape=jax.ShapeDtypeStruct((N * out_chs, HW), x_nchw.dtype),
        grid=(N // bt,),
        in_specs=[
            pl.BlockSpec((bt * in_chs, HW), lambda n: (n, 0)),
            pl.BlockSpec(masks.shape, lambda n: (0, 0)),   # constant operands:
            pl.BlockSpec(pack1.shape, lambda n: (0, 0)),   # constant index_map,
            pl.BlockSpec(pack2.shape, lambda n: (0, 0)),   # stay resident
        ],
        out_specs=pl.BlockSpec((bt * out_chs, HW), lambda n: (n, 0)),
        compiler_params=pltpu.CompilerParams(dimension_semantics=("parallel",)),
    )(x, masks, pack1, pack2)
    return out.reshape(N, out_chs, H, W)


# ----------------------- deterministic parameter init ----------------------

def _fold_bn(key, c):
    k1, k2, k3, k4 = jax.random.split(key, 4)
    gamma = jax.random.uniform(k1, (c,), jnp.float32, 0.5, 1.5)
    beta = 0.1 * jax.random.normal(k2, (c,), jnp.float32)
    mean = 0.1 * jax.random.normal(k3, (c,), jnp.float32)
    var = jax.random.uniform(k4, (c,), jnp.float32, 0.5, 1.5)
    scale = gamma / jnp.sqrt(var + 1e-5)
    bias = beta - mean * scale
    return scale.reshape(1, c), bias.reshape(1, c)


def init_params(key, in_chs, mid_chs, out_chs):
    c1i = math.ceil(mid_chs / 2)                 # ghost1 init/new channels
    c2i = math.ceil(out_chs / 2)                 # ghost2 init/new channels
    ks = jax.random.split(key, 8)
    w1p = 0.3 * jax.random.normal(ks[0], (in_chs, c1i), jnp.float32)
    s1p, b1p = _fold_bn(ks[1], c1i)
    w1d = 0.3 * jax.random.normal(ks[2], (9, c1i), jnp.float32)   # 3x3 dw taps
    s1d, b1d = _fold_bn(ks[3], c1i)
    w2p = 0.3 * jax.random.normal(ks[4], (mid_chs, c2i), jnp.float32)
    s2p, b2p = _fold_bn(ks[5], c2i)
    w2d = 0.3 * jax.random.normal(ks[6], (9, c2i), jnp.float32)
    s2d, b2d = _fold_bn(ks[7], c2i)
    return dict(w1p=w1p, s1p=s1p, b1p=b1p, w1d=w1d, s1d=s1d, b1d=b1d,
                w2p=w2p, s2p=s2p, b2p=b2p, w2d=w2d, s2d=s2d, b2d=b2d,
                mid_chs=mid_chs, out_chs=out_chs)


# --------------------------- pure-JAX reference ---------------------------

def _ghost_module_ref(x_nhwc, wp, sp, bp, wd, sd, bd, relu, oup):
    w = wp.reshape(1, 1, wp.shape[0], wp.shape[1])
    y = jax.lax.conv_general_dilated(x_nhwc, w, (1, 1), "SAME",
                                     dimension_numbers=("NHWC", "HWIO", "NHWC"))
    y = y * sp.reshape(1, 1, 1, -1) + bp.reshape(1, 1, 1, -1)
    if relu:
        y = jnp.maximum(y, 0.0)
    c = y.shape[-1]
    wdw = wd.reshape(3, 3, 1, c)
    z = jax.lax.conv_general_dilated(y, wdw, (1, 1), "SAME",
                                     dimension_numbers=("NHWC", "HWIO", "NHWC"),
                                     feature_group_count=c)
    z = z * sd.reshape(1, 1, 1, -1) + bd.reshape(1, 1, 1, -1)
    if relu:
        z = jnp.maximum(z, 0.0)
    return jnp.concatenate([y, z], axis=-1)[..., :oup]


def ghost_bottleneck_ref(x_nchw, p):
    x = jnp.transpose(x_nchw, (0, 2, 3, 1))
    h = _ghost_module_ref(x, p["w1p"], p["s1p"], p["b1p"],
                          p["w1d"], p["s1d"], p["b1d"], True, p["mid_chs"])
    h = _ghost_module_ref(h, p["w2p"], p["s2p"], p["b2p"],
                          p["w2d"], p["s2d"], p["b2d"], False, p["out_chs"])
    return jnp.transpose(h + x, (0, 3, 1, 2))


# ----------------------------------- main ----------------------------------

if __name__ == "__main__":
    key = jax.random.PRNGKey(0)
    kx, kp = jax.random.split(key)

    N, in_chs, H, W = 2, 4, 16, 16
    mid_chs, out_chs = 8, 4      # GhostBottleneck(4, 8, 4): stride=1, se_ratio=0.0

    x = jax.random.normal(kx, (N, in_chs, H, W), jnp.float32)
    params = init_params(kp, in_chs, mid_chs, out_chs)

    out = jax.block_until_ready(ghost_bottleneck(x, params))

    ref = ghost_bottleneck_ref(x, params)
    assert out.shape == (N, out_chs, H, W)
    np.testing.assert_allclose(np.asarray(out), np.asarray(ref),
                               rtol=1e-4, atol=1e-4)
    print("KERNEL_OK")
</pallas_src>

<mosaic_0001>
module attributes {stable_mosaic.version = 11 : i64} {
  func.func @ghost_bottleneck_kernel(%arg0: i32, %arg1: memref<8x256xf32, #tpu.memory_space<vmem>>, %arg2: memref<9x256xf32, #tpu.memory_space<vmem>>, %arg3: memref<8x15xf32, #tpu.memory_space<vmem>>, %arg4: memref<4x19xf32, #tpu.memory_space<vmem>>, %arg5: memref<8x256xf32, #tpu.memory_space<vmem>>) attributes {dimension_semantics = [#tpu.dimension_semantics<parallel>], iteration_bounds = array<i64: 1>, scalar_prefetch = 0 : i64, scratch_operands = 0 : i64, tpu.core_type = #tpu.core_type<tc>, window_params = [{transform_indices = @transform_0, window_bounds = array<i64: 8, 256>}, {pipeline_mode = #tpu.pipeline_mode<synchronous>, transform_indices = @transform_1, window_bounds = array<i64: 9, 256>}, {pipeline_mode = #tpu.pipeline_mode<synchronous>, transform_indices = @transform_2, window_bounds = array<i64: 8, 15>}, {pipeline_mode = #tpu.pipeline_mode<synchronous>, transform_indices = @transform_3, window_bounds = array<i64: 4, 19>}, {transform_indices = @transform_4, window_bounds = array<i64: 8, 256>}]} {
    %c0 = arith.constant 0 : index
    %c0_0 = arith.constant 0 : index
    %0 = vector.load %arg1[%c0, %c0_0] : memref<8x256xf32, #tpu.memory_space<vmem>>, vector<8x256xf32>
    %c0_1 = arith.constant 0 : index
    %c0_2 = arith.constant 0 : index
    %1 = vector.load %arg2[%c0_1, %c0_2] : memref<9x256xf32, #tpu.memory_space<vmem>>, vector<9x256xf32>
    %c0_3 = arith.constant 0 : index
    %c0_4 = arith.constant 0 : index
    %2 = vector.load %arg3[%c0_3, %c0_4] : memref<8x15xf32, #tpu.memory_space<vmem>>, vector<8x15xf32>
    %3 = vector.extract_strided_slice %2 {offsets = [0, 0], sizes = [4, 4], strides = [1, 1]} : vector<8x15xf32> to vector<4x4xf32>
    %4 = vector.extract_strided_slice %2 {offsets = [0, 4], sizes = [8, 9], strides = [1, 1]} : vector<8x15xf32> to vector<8x9xf32>
    %5 = vector.extract_strided_slice %2 {offsets = [0, 13], sizes = [8, 1], strides = [1, 1]} : vector<8x15xf32> to vector<8x1xf32>
    %6 = vector.extract_strided_slice %2 {offsets = [0, 14], sizes = [8, 1], strides = [1, 1]} : vector<8x15xf32> to vector<8x1xf32>
    %c0_5 = arith.constant 0 : index
    %c0_6 = arith.constant 0 : index
    %7 = vector.load %arg4[%c0_5, %c0_6] : memref<4x19xf32, #tpu.memory_space<vmem>>, vector<4x19xf32>
    %8 = vector.extract_strided_slice %7 {offsets = [0, 0], sizes = [2, 8], strides = [1, 1]} : vector<4x19xf32> to vector<2x8xf32>
    %9 = vector.extract_strided_slice %7 {offsets = [0, 8], sizes = [4, 9], strides = [1, 1]} : vector<4x19xf32> to vector<4x9xf32>
    %10 = vector.extract_strided_slice %7 {offsets = [0, 17], sizes = [4, 1], strides = [1, 1]} : vector<4x19xf32> to vector<4x1xf32>
    %11 = vector.extract_strided_slice %7 {offsets = [0, 18], sizes = [4, 1], strides = [1, 1]} : vector<4x19xf32> to vector<4x1xf32>
    %12 = vector.extract_strided_slice %0 {offsets = [0, 0], sizes = [1, 256], strides = [1, 1]} : vector<8x256xf32> to vector<1x256xf32>
    %13 = vector.extract_strided_slice %0 {offsets = [1, 0], sizes = [1, 256], strides = [1, 1]} : vector<8x256xf32> to vector<1x256xf32>
    %14 = vector.extract_strided_slice %0 {offsets = [2, 0], sizes = [1, 256], strides = [1, 1]} : vector<8x256xf32> to vector<1x256xf32>
    %15 = vector.extract_strided_slice %0 {offsets = [3, 0], sizes = [1, 256], strides = [1, 1]} : vector<8x256xf32> to vector<1x256xf32>
    %16 = vector.extract_strided_slice %3 {offsets = [0, 0], sizes = [4, 1], strides = [1, 1]} : vector<4x4xf32> to vector<4x1xf32>
    %17 = vector.broadcast %16 : vector<4x1xf32> to vector<4x256xf32>
    %18 = vector.broadcast %12 : vector<1x256xf32> to vector<4x256xf32>
    %19 = arith.mulf %17, %18 : vector<4x256xf32>
    %20 = vector.extract_strided_slice %3 {offsets = [0, 1], sizes = [4, 1], strides = [1, 1]} : vector<4x4xf32> to vector<4x1xf32>
    %21 = vector.broadcast %20 : vector<4x1xf32> to vector<4x256xf32>
    %22 = vector.broadcast %13 : vector<1x256xf32> to vector<4x256xf32>
    %23 = arith.mulf %21, %22 : vector<4x256xf32>
    %24 = arith.addf %19, %23 : vector<4x256xf32>
    %25 = vector.extract_strided_slice %3 {offsets = [0, 2], sizes = [4, 1], strides = [1, 1]} : vector<4x4xf32> to vector<4x1xf32>
    %26 = vector.broadcast %25 : vector<4x1xf32> to vector<4x256xf32>
    %27 = vector.broadcast %14 : vector<1x256xf32> to vector<4x256xf32>
    %28 = arith.mulf %26, %27 : vector<4x256xf32>
    %29 = arith.addf %24, %28 : vector<4x256xf32>
    %30 = vector.extract_strided_slice %3 {offsets = [0, 3], sizes = [4, 1], strides = [1, 1]} : vector<4x4xf32> to vector<4x1xf32>
    %31 = vector.broadcast %30 : vector<4x1xf32> to vector<4x256xf32>
    %32 = vector.broadcast %15 : vector<1x256xf32> to vector<4x256xf32>
    %33 = arith.mulf %31, %32 : vector<4x256xf32>
    %34 = arith.addf %29, %33 : vector<4x256xf32>
    %35 = vector.extract_strided_slice %0 {offsets = [4, 0], sizes = [1, 256], strides = [1, 1]} : vector<8x256xf32> to vector<1x256xf32>
    %36 = vector.extract_strided_slice %0 {offsets = [5, 0], sizes = [1, 256], strides = [1, 1]} : vector<8x256xf32> to vector<1x256xf32>
    %37 = vector.extract_strided_slice %0 {offsets = [6, 0], sizes = [1, 256], strides = [1, 1]} : vector<8x256xf32> to vector<1x256xf32>
    %38 = vector.extract_strided_slice %0 {offsets = [7, 0], sizes = [1, 256], strides = [1, 1]} : vector<8x256xf32> to vector<1x256xf32>
    %39 = vector.extract_strided_slice %3 {offsets = [0, 0], sizes = [4, 1], strides = [1, 1]} : vector<4x4xf32> to vector<4x1xf32>
    %40 = vector.broadcast %39 : vector<4x1xf32> to vector<4x256xf32>
    %41 = vector.broadcast %35 : vector<1x256xf32> to vector<4x256xf32>
    %42 = arith.mulf %40, %41 : vector<4x256xf32>
    %43 = vector.extract_strided_slice %3 {offsets = [0, 1], sizes = [4, 1], strides = [1, 1]} : vector<4x4xf32> to vector<4x1xf32>
    %44 = vector.broadcast %43 : vector<4x1xf32> to vector<4x256xf32>
    %45 = vector.broadcast %36 : vector<1x256xf32> to vector<4x256xf32>
    %46 = arith.mulf %44, %45 : vector<4x256xf32>
    %47 = arith.addf %42, %46 : vector<4x256xf32>
    %48 = vector.extract_strided_slice %3 {offsets = [0, 2], sizes = [4, 1], strides = [1, 1]} : vector<4x4xf32> to vector<4x1xf32>
    %49 = vector.broadcast %48 : vector<4x1xf32> to vector<4x256xf32>
    %50 = vector.broadcast %37 : vector<1x256xf32> to vector<4x256xf32>
    %51 = arith.mulf %49, %50 : vector<4x256xf32>
    %52 = arith.addf %47, %51 : vector<4x256xf32>
    %53 = vector.extract_strided_slice %3 {offsets = [0, 3], sizes = [4, 1], strides = [1, 1]} : vector<4x4xf32> to vector<4x1xf32>
    %54 = vector.broadcast %53 : vector<4x1xf32> to vector<4x256xf32>
    %55 = vector.broadcast %38 : vector<1x256xf32> to vector<4x256xf32>
    %56 = arith.mulf %54, %55 : vector<4x256xf32>
    %57 = arith.addf %52, %56 : vector<4x256xf32>
    %58 = tpu.concatenate %34, %57 in 0 : vector<4x256xf32>, vector<4x256xf32> -> vector<8x256xf32>
    %59 = vector.broadcast %5 : vector<8x1xf32> to vector<8x256xf32>
    %60 = arith.addf %58, %59 : vector<8x256xf32>
    %cst = arith.constant 0.000000e+00 : f32
    %61 = vector.broadcast %cst : f32 to vector<8x256xf32>
    %62 = arith.maximumf %60, %61 : vector<8x256xf32>
    %63 = vector.extract_strided_slice %4 {offsets = [0, 4], sizes = [8, 1], strides = [1, 1]} : vector<8x9xf32> to vector<8x1xf32>
    %64 = vector.broadcast %63 : vector<8x1xf32> to vector<8x256xf32>
    %65 = arith.mulf %62, %64 : vector<8x256xf32>
    %c17_i32 = arith.constant 17 : i32
    %66 = tpu.dynamic_rotate %62 by %c17_i32 dim 1 : vector<8x256xf32>, i32 -> vector<8x256xf32>
    %67 = vector.extract_strided_slice %1 {offsets = [0, 0], sizes = [1, 256], strides = [1, 1]} : vector<9x256xf32> to vector<1x256xf32>
    %68 = vector.broadcast %67 : vector<1x256xf32> to vector<8x256xf32>
    %69 = arith.mulf %66, %68 : vector<8x256xf32>
    %70 = vector.extract_strided_slice %4 {offsets = [0, 0], sizes = [8, 1], strides = [1, 1]} : vector<8x9xf32> to vector<8x1xf32>
    %71 = vector.broadcast %70 : vector<8x1xf32> to vector<8x256xf32>
    %72 = arith.mulf %69, %71 : vector<8x256xf32>
    %73 = arith.addf %65, %72 : vector<8x256xf32>
    %c16_i32 = arith.constant 16 : i32
    %74 = tpu.dynamic_rotate %62 by %c16_i32 dim 1 : vector<8x256xf32>, i32 -> vector<8x256xf32>
    %75 = vector.extract_strided_slice %1 {offsets = [1, 0], sizes = [1, 256], strides = [1, 1]} : vector<9x256xf32> to vector<1x256xf32>
    %76 = vector.broadcast %75 : vector<1x256xf32> to vector<8x256xf32>
    %77 = arith.mulf %74, %76 : vector<8x256xf32>
    %78 = vector.extract_strided_slice %4 {offsets = [0, 1], sizes = [8, 1], strides = [1, 1]} : vector<8x9xf32> to vector<8x1xf32>
    %79 = vector.broadcast %78 : vector<8x1xf32> to vector<8x256xf32>
    %80 = arith.mulf %77, %79 : vector<8x256xf32>
    %81 = arith.addf %73, %80 : vector<8x256xf32>
    %c15_i32 = arith.constant 15 : i32
    %82 = tpu.dynamic_rotate %62 by %c15_i32 dim 1 : vector<8x256xf32>, i32 -> vector<8x256xf32>
    %83 = vector.extract_strided_slice %1 {offsets = [2, 0], sizes = [1, 256], strides = [1, 1]} : vector<9x256xf32> to vector<1x256xf32>
    %84 = vector.broadcast %83 : vector<1x256xf32> to vector<8x256xf32>
    %85 = arith.mulf %82, %84 : vector<8x256xf32>
    %86 = vector.extract_strided_slice %4 {offsets = [0, 2], sizes = [8, 1], strides = [1, 1]} : vector<8x9xf32> to vector<8x1xf32>
    %87 = vector.broadcast %86 : vector<8x1xf32> to vector<8x256xf32>
    %88 = arith.mulf %85, %87 : vector<8x256xf32>
    %89 = arith.addf %81, %88 : vector<8x256xf32>
    %c1_i32 = arith.constant 1 : i32
    %90 = tpu.dynamic_rotate %62 by %c1_i32 dim 1 : vector<8x256xf32>, i32 -> vector<8x256xf32>
    %91 = vector.extract_strided_slice %1 {offsets = [3, 0], sizes = [1, 256], strides = [1, 1]} : vector<9x256xf32> to vector<1x256xf32>
    %92 = vector.broadcast %91 : vector<1x256xf32> to vector<8x256xf32>
    %93 = arith.mulf %90, %92 : vector<8x256xf32>
    %94 = vector.extract_strided_slice %4 {offsets = [0, 3], sizes = [8, 1], strides = [1, 1]} : vector<8x9xf32> to vector<8x1xf32>
    %95 = vector.broadcast %94 : vector<8x1xf32> to vector<8x256xf32>
    %96 = arith.mulf %93, %95 : vector<8x256xf32>
    %97 = arith.addf %89, %96 : vector<8x256xf32>
    %c255_i32 = arith.constant 255 : i32
    %98 = tpu.dynamic_rotate %62 by %c255_i32 dim 1 : vector<8x256xf32>, i32 -> vector<8x256xf32>
    %99 = vector.extract_strided_slice %1 {offsets = [5, 0], sizes = [1, 256], strides = [1, 1]} : vector<9x256xf32> to vector<1x256xf32>
    %100 = vector.broadcast %99 : vector<1x256xf32> to vector<8x256xf32>
    %101 = arith.mulf %98, %100 : vector<8x256xf32>
    %102 = vector.extract_strided_slice %4 {offsets = [0, 5], sizes = [8, 1], strides = [1, 1]} : vector<8x9xf32> to vector<8x1xf32>
    %103 = vector.broadcast %102 : vector<8x1xf32> to vector<8x256xf32>
    %104 = arith.mulf %101, %103 : vector<8x256xf32>
    %105 = arith.addf %97, %104 : vector<8x256xf32>
    %c241_i32 = arith.constant 241 : i32
    %106 = tpu.dynamic_rotate %62 by %c241_i32 dim 1 : vector<8x256xf32>, i32 -> vector<8x256xf32>
    %107 = vector.extract_strided_slice %1 {offsets = [6, 0], sizes = [1, 256], strides = [1, 1]} : vector<9x256xf32> to vector<1x256xf32>
    %108 = vector.broadcast %107 : vector<1x256xf32> to vector<8x256xf32>
    %109 = arith.mulf %106, %108 : vector<8x256xf32>
    %110 = vector.extract_strided_slice %4 {offsets = [0, 6], sizes = [8, 1], strides = [1, 1]} : vector<8x9xf32> to vector<8x1xf32>
    %111 = vector.broadcast %110 : vector<8x1xf32> to vector<8x256xf32>
    %112 = arith.mulf %109, %111 : vector<8x256xf32>
    %113 = arith.addf %105, %112 : vector<8x256xf32>
    %c240_i32 = arith.constant 240 : i32
    %114 = tpu.dynamic_rotate %62 by %c240_i32 dim 1 : vector<8x256xf32>, i32 -> vector<8x256xf32>
    %115 = vector.extract_strided_slice %1 {offsets = [7, 0], sizes = [1, 256], strides = [1, 1]} : vector<9x256xf32> to vector<1x256xf32>
    %116 = vector.broadcast %115 : vector<1x256xf32> to vector<8x256xf32>
    %117 = arith.mulf %114, %116 : vector<8x256xf32>
    %118 = vector.extract_strided_slice %4 {offsets = [0, 7], sizes = [8, 1], strides = [1, 1]} : vector<8x9xf32> to vector<8x1xf32>
    %119 = vector.broadcast %118 : vector<8x1xf32> to vector<8x256xf32>
    %120 = arith.mulf %117, %119 : vector<8x256xf32>
    %121 = arith.addf %113, %120 : vector<8x256xf32>
    %c239_i32 = arith.constant 239 : i32
    %122 = tpu.dynamic_rotate %62 by %c239_i32 dim 1 : vector<8x256xf32>, i32 -> vector<8x256xf32>
    %123 = vector.extract_strided_slice %1 {offsets = [8, 0], sizes = [1, 256], strides = [1, 1]} : vector<9x256xf32> to vector<1x256xf32>
    %124 = vector.broadcast %123 : vector<1x256xf32> to vector<8x256xf32>
    %125 = arith.mulf %122, %124 : vector<8x256xf32>
    %126 = vector.extract_strided_slice %4 {offsets = [0, 8], sizes = [8, 1], strides = [1, 1]} : vector<8x9xf32> to vector<8x1xf32>
    %127 = vector.broadcast %126 : vector<8x1xf32> to vector<8x256xf32>
    %128 = arith.mulf %125, %127 : vector<8x256xf32>
    %129 = arith.addf %121, %128 : vector<8x256xf32>
    %130 = vector.broadcast %6 : vector<8x1xf32> to vector<8x256xf32>
    %131 = arith.addf %129, %130 : vector<8x256xf32>
    %cst_7 = arith.constant 0.000000e+00 : f32
    %132 = vector.broadcast %cst_7 : f32 to vector<8x256xf32>
    %133 = arith.maximumf %131, %132 : vector<8x256xf32>
    %134 = vector.extract_strided_slice %62 {offsets = [0, 0], sizes = [1, 256], strides = [1, 1]} : vector<8x256xf32> to vector<1x256xf32>
    %135 = vector.extract_strided_slice %62 {offsets = [1, 0], sizes = [1, 256], strides = [1, 1]} : vector<8x256xf32> to vector<1x256xf32>
    %136 = vector.extract_strided_slice %62 {offsets = [2, 0], sizes = [1, 256], strides = [1, 1]} : vector<8x256xf32> to vector<1x256xf32>
    %137 = vector.extract_strided_slice %62 {offsets = [3, 0], sizes = [1, 256], strides = [1, 1]} : vector<8x256xf32> to vector<1x256xf32>
    %138 = vector.extract_strided_slice %133 {offsets = [0, 0], sizes = [1, 256], strides = [1, 1]} : vector<8x256xf32> to vector<1x256xf32>
    %139 = vector.extract_strided_slice %133 {offsets = [1, 0], sizes = [1, 256], strides = [1, 1]} : vector<8x256xf32> to vector<1x256xf32>
    %140 = vector.extract_strided_slice %133 {offsets = [2, 0], sizes = [1, 256], strides = [1, 1]} : vector<8x256xf32> to vector<1x256xf32>
    %141 = vector.extract_strided_slice %133 {offsets = [3, 0], sizes = [1, 256], strides = [1, 1]} : vector<8x256xf32> to vector<1x256xf32>
    %142 = vector.extract_strided_slice %8 {offsets = [0, 0], sizes = [2, 1], strides = [1, 1]} : vector<2x8xf32> to vector<2x1xf32>
    %143 = vector.broadcast %142 : vector<2x1xf32> to vector<2x256xf32>
    %144 = vector.broadcast %134 : vector<1x256xf32> to vector<2x256xf32>
    %145 = arith.mulf %143, %144 : vector<2x256xf32>
    %146 = vector.extract_strided_slice %8 {offsets = [0, 1], sizes = [2, 1], strides = [1, 1]} : vector<2x8xf32> to vector<2x1xf32>
    %147 = vector.broadcast %146 : vector<2x1xf32> to vector<2x256xf32>
    %148 = vector.broadcast %135 : vector<1x256xf32> to vector<2x256xf32>
    %149 = arith.mulf %147, %148 : vector<2x256xf32>
    %150 = arith.addf %145, %149 : vector<2x256xf32>
    %151 = vector.extract_strided_slice %8 {offsets = [0, 2], sizes = [2, 1], strides = [1, 1]} : vector<2x8xf32> to vector<2x1xf32>
    %152 = vector.broadcast %151 : vector<2x1xf32> to vector<2x256xf32>
    %153 = vector.broadcast %136 : vector<1x256xf32> to vector<2x256xf32>
    %154 = arith.mulf %152, %153 : vector<2x256xf32>
    %155 = arith.addf %150, %154 : vector<2x256xf32>
    %156 = vector.extract_strided_slice %8 {offsets = [0, 3], sizes = [2, 1], strides = [1, 1]} : vector<2x8xf32> to vector<2x1xf32>
    %157 = vector.broadcast %156 : vector<2x1xf32> to vector<2x256xf32>
    %158 = vector.broadcast %137 : vector<1x256xf32> to vector<2x256xf32>
    %159 = arith.mulf %157, %158 : vector<2x256xf32>
    %160 = arith.addf %155, %159 : vector<2x256xf32>
    %161 = vector.extract_strided_slice %8 {offsets = [0, 4], sizes = [2, 1], strides = [1, 1]} : vector<2x8xf32> to vector<2x1xf32>
    %162 = vector.broadcast %161 : vector<2x1xf32> to vector<2x256xf32>
    %163 = vector.broadcast %138 : vector<1x256xf32> to vector<2x256xf32>
    %164 = arith.mulf %162, %163 : vector<2x256xf32>
    %165 = arith.addf %160, %164 : vector<2x256xf32>
    %166 = vector.extract_strided_slice %8 {offsets = [0, 5], sizes = [2, 1], strides = [1, 1]} : vector<2x8xf32> to vector<2x1xf32>
    %167 = vector.broadcast %166 : vector<2x1xf32> to vector<2x256xf32>
    %168 = vector.broadcast %139 : vector<1x256xf32> to vector<2x256xf32>
    %169 = arith.mulf %167, %168 : vector<2x256xf32>
    %170 = arith.addf %165, %169 : vector<2x256xf32>
    %171 = vector.extract_strided_slice %8 {offsets = [0, 6], sizes = [2, 1], strides = [1, 1]} : vector<2x8xf32> to vector<2x1xf32>
    %172 = vector.broadcast %171 : vector<2x1xf32> to vector<2x256xf32>
    %173 = vector.broadcast %140 : vector<1x256xf32> to vector<2x256xf32>
    %174 = arith.mulf %172, %173 : vector<2x256xf32>
    %175 = arith.addf %170, %174 : vector<2x256xf32>
    %176 = vector.extract_strided_slice %8 {offsets = [0, 7], sizes = [2, 1], strides = [1, 1]} : vector<2x8xf32> to vector<2x1xf32>
    %177 = vector.broadcast %176 : vector<2x1xf32> to vector<2x256xf32>
    %178 = vector.broadcast %141 : vector<1x256xf32> to vector<2x256xf32>
    %179 = arith.mulf %177, %178 : vector<2x256xf32>
    %180 = arith.addf %175, %179 : vector<2x256xf32>
    %181 = vector.extract_strided_slice %62 {offsets = [4, 0], sizes = [1, 256], strides = [1, 1]} : vector<8x256xf32> to vector<1x256xf32>
    %182 = vector.extract_strided_slice %62 {offsets = [5, 0], sizes = [1, 256], strides = [1, 1]} : vector<8x256xf32> to vector<1x256xf32>
    %183 = vector.extract_strided_slice %62 {offsets = [6, 0], sizes = [1, 256], strides = [1, 1]} : vector<8x256xf32> to vector<1x256xf32>
    %184 = vector.extract_strided_slice %62 {offsets = [7, 0], sizes = [1, 256], strides = [1, 1]} : vector<8x256xf32> to vector<1x256xf32>
    %185 = vector.extract_strided_slice %133 {offsets = [4, 0], sizes = [1, 256], strides = [1, 1]} : vector<8x256xf32> to vector<1x256xf32>
    %186 = vector.extract_strided_slice %133 {offsets = [5, 0], sizes = [1, 256], strides = [1, 1]} : vector<8x256xf32> to vector<1x256xf32>
    %187 = vector.extract_strided_slice %133 {offsets = [6, 0], sizes = [1, 256], strides = [1, 1]} : vector<8x256xf32> to vector<1x256xf32>
    %188 = vector.extract_strided_slice %133 {offsets = [7, 0], sizes = [1, 256], strides = [1, 1]} : vector<8x256xf32> to vector<1x256xf32>
    %189 = vector.extract_strided_slice %8 {offsets = [0, 0], sizes = [2, 1], strides = [1, 1]} : vector<2x8xf32> to vector<2x1xf32>
    %190 = vector.broadcast %189 : vector<2x1xf32> to vector<2x256xf32>
    %191 = vector.broadcast %181 : vector<1x256xf32> to vector<2x256xf32>
    %192 = arith.mulf %190, %191 : vector<2x256xf32>
    %193 = vector.extract_strided_slice %8 {offsets = [0, 1], sizes = [2, 1], strides = [1, 1]} : vector<2x8xf32> to vector<2x1xf32>
    %194 = vector.broadcast %193 : vector<2x1xf32> to vector<2x256xf32>
    %195 = vector.broadcast %182 : vector<1x256xf32> to vector<2x256xf32>
    %196 = arith.mulf %194, %195 : vector<2x256xf32>
    %197 = arith.addf %192, %196 : vector<2x256xf32>
    %198 = vector.extract_strided_slice %8 {offsets = [0, 2], sizes = [2, 1], strides = [1, 1]} : vector<2x8xf32> to vector<2x1xf32>
    %199 = vector.broadcast %198 : vector<2x1xf32> to vector<2x256xf32>
    %200 = vector.broadcast %183 : vector<1x256xf32> to vector<2x256xf32>
    %201 = arith.mulf %199, %200 : vector<2x256xf32>
    %202 = arith.addf %197, %201 : vector<2x256xf32>
    %203 = vector.extract_strided_slice %8 {offsets = [0, 3], sizes = [2, 1], strides = [1, 1]} : vector<2x8xf32> to vector<2x1xf32>
    %204 = vector.broadcast %203 : vector<2x1xf32> to vector<2x256xf32>
    %205 = vector.broadcast %184 : vector<1x256xf32> to vector<2x256xf32>
    %206 = arith.mulf %204, %205 : vector<2x256xf32>
    %207 = arith.addf %202, %206 : vector<2x256xf32>
    %208 = vector.extract_strided_slice %8 {offsets = [0, 4], sizes = [2, 1], strides = [1, 1]} : vector<2x8xf32> to vector<2x1xf32>
    %209 = vector.broadcast %208 : vector<2x1xf32> to vector<2x256xf32>
    %210 = vector.broadcast %185 : vector<1x256xf32> to vector<2x256xf32>
    %211 = arith.mulf %209, %210 : vector<2x256xf32>
    %212 = arith.addf %207, %211 : vector<2x256xf32>
    %213 = vector.extract_strided_slice %8 {offsets = [0, 5], sizes = [2, 1], strides = [1, 1]} : vector<2x8xf32> to vector<2x1xf32>
    %214 = vector.broadcast %213 : vector<2x1xf32> to vector<2x256xf32>
    %215 = vector.broadcast %186 : vector<1x256xf32> to vector<2x256xf32>
    %216 = arith.mulf %214, %215 : vector<2x256xf32>
    %217 = arith.addf %212, %216 : vector<2x256xf32>
    %218 = vector.extract_strided_slice %8 {offsets = [0, 6], sizes = [2, 1], strides = [1, 1]} : vector<2x8xf32> to vector<2x1xf32>
    %219 = vector.broadcast %218 : vector<2x1xf32> to vector<2x256xf32>
    %220 = vector.broadcast %187 : vector<1x256xf32> to vector<2x256xf32>
    %221 = arith.mulf %219, %220 : vector<2x256xf32>
    %222 = arith.addf %217, %221 : vector<2x256xf32>
    %223 = vector.extract_strided_slice %8 {offsets = [0, 7], sizes = [2, 1], strides = [1, 1]} : vector<2x8xf32> to vector<2x1xf32>
    %224 = vector.broadcast %223 : vector<2x1xf32> to vector<2x256xf32>
    %225 = vector.broadcast %188 : vector<1x256xf32> to vector<2x256xf32>
    %226 = arith.mulf %224, %225 : vector<2x256xf32>
    %227 = arith.addf %222, %226 : vector<2x256xf32>
    %228 = tpu.concatenate %180, %227 in 0 : vector<2x256xf32>, vector<2x256xf32> -> vector<4x256xf32>
    %229 = vector.broadcast %10 : vector<4x1xf32> to vector<4x256xf32>
    %230 = arith.addf %228, %229 : vector<4x256xf32>
    %231 = vector.extract_strided_slice %9 {offsets = [0, 4], sizes = [4, 1], strides = [1, 1]} : vector<4x9xf32> to vector<4x1xf32>
    %232 = vector.broadcast %231 : vector<4x1xf32> to vector<4x256xf32>
    %233 = arith.mulf %230, %232 : vector<4x256xf32>
    %c17_i32_8 = arith.constant 17 : i32
    %234 = tpu.dynamic_rotate %230 by %c17_i32_8 dim 1 : vector<4x256xf32>, i32 -> vector<4x256xf32>
    %235 = vector.extract_strided_slice %1 {offsets = [0, 0], sizes = [1, 256], strides = [1, 1]} : vector<9x256xf32> to vector<1x256xf32>
    %236 = vector.broadcast %235 : vector<1x256xf32> to vector<4x256xf32>
    %237 = arith.mulf %234, %236 : vector<4x256xf32>
    %238 = vector.extract_strided_slice %9 {offsets = [0, 0], sizes = [4, 1], strides = [1, 1]} : vector<4x9xf32> to vector<4x1xf32>
    %239 = vector.broadcast %238 : vector<4x1xf32> to vector<4x256xf32>
    %240 = arith.mulf %237, %239 : vector<4x256xf32>
    %241 = arith.addf %233, %240 : vector<4x256xf32>
    %c16_i32_9 = arith.constant 16 : i32
    %242 = tpu.dynamic_rotate %230 by %c16_i32_9 dim 1 : vector<4x256xf32>, i32 -> vector<4x256xf32>
    %243 = vector.extract_strided_slice %1 {offsets = [1, 0], sizes = [1, 256], strides = [1, 1]} : vector<9x256xf32> to vector<1x256xf32>
    %244 = vector.broadcast %243 : vector<1x256xf32> to vector<4x256xf32>
    %245 = arith.mulf %242, %244 : vector<4x256xf32>
    %246 = vector.extract_strided_slice %9 {offsets = [0, 1], sizes = [4, 1], strides = [1, 1]} : vector<4x9xf32> to vector<4x1xf32>
    %247 = vector.broadcast %246 : vector<4x1xf32> to vector<4x256xf32>
    %248 = arith.mulf %245, %247 : vector<4x256xf32>
    %249 = arith.addf %241, %248 : vector<4x256xf32>
    %c15_i32_10 = arith.constant 15 : i32
    %250 = tpu.dynamic_rotate %230 by %c15_i32_10 dim 1 : vector<4x256xf32>, i32 -> vector<4x256xf32>
    %251 = vector.extract_strided_slice %1 {offsets = [2, 0], sizes = [1, 256], strides = [1, 1]} : vector<9x256xf32> to vector<1x256xf32>
    %252 = vector.broadcast %251 : vector<1x256xf32> to vector<4x256xf32>
    %253 = arith.mulf %250, %252 : vector<4x256xf32>
    %254 = vector.extract_strided_slice %9 {offsets = [0, 2], sizes = [4, 1], strides = [1, 1]} : vector<4x9xf32> to vector<4x1xf32>
    %255 = vector.broadcast %254 : vector<4x1xf32> to vector<4x256xf32>
    %256 = arith.mulf %253, %255 : vector<4x256xf32>
    %257 = arith.addf %249, %256 : vector<4x256xf32>
    %c1_i32_11 = arith.constant 1 : i32
    %258 = tpu.dynamic_rotate %230 by %c1_i32_11 dim 1 : vector<4x256xf32>, i32 -> vector<4x256xf32>
    %259 = vector.extract_strided_slice %1 {offsets = [3, 0], sizes = [1, 256], strides = [1, 1]} : vector<9x256xf32> to vector<1x256xf32>
    %260 = vector.broadcast %259 : vector<1x256xf32> to vector<4x256xf32>
    %261 = arith.mulf %258, %260 : vector<4x256xf32>
    %262 = vector.extract_strided_slice %9 {offsets = [0, 3], sizes = [4, 1], strides = [1, 1]} : vector<4x9xf32> to vector<4x1xf32>
    %263 = vector.broadcast %262 : vector<4x1xf32> to vector<4x256xf32>
    %264 = arith.mulf %261, %263 : vector<4x256xf32>
    %265 = arith.addf %257, %264 : vector<4x256xf32>
    %c255_i32_12 = arith.constant 255 : i32
    %266 = tpu.dynamic_rotate %230 by %c255_i32_12 dim 1 : vector<4x256xf32>, i32 -> vector<4x256xf32>
    %267 = vector.extract_strided_slice %1 {offsets = [5, 0], sizes = [1, 256], strides = [1, 1]} : vector<9x256xf32> to vector<1x256xf32>
    %268 = vector.broadcast %267 : vector<1x256xf32> to vector<4x256xf32>
    %269 = arith.mulf %266, %268 : vector<4x256xf32>
    %270 = vector.extract_strided_slice %9 {offsets = [0, 5], sizes = [4, 1], strides = [1, 1]} : vector<4x9xf32> to vector<4x1xf32>
    %271 = vector.broadcast %270 : vector<4x1xf32> to vector<4x256xf32>
    %272 = arith.mulf %269, %271 : vector<4x256xf32>
    %273 = arith.addf %265, %272 : vector<4x256xf32>
    %c241_i32_13 = arith.constant 241 : i32
    %274 = tpu.dynamic_rotate %230 by %c241_i32_13 dim 1 : vector<4x256xf32>, i32 -> vector<4x256xf32>
    %275 = vector.extract_strided_slice %1 {offsets = [6, 0], sizes = [1, 256], strides = [1, 1]} : vector<9x256xf32> to vector<1x256xf32>
    %276 = vector.broadcast %275 : vector<1x256xf32> to vector<4x256xf32>
    %277 = arith.mulf %274, %276 : vector<4x256xf32>
    %278 = vector.extract_strided_slice %9 {offsets = [0, 6], sizes = [4, 1], strides = [1, 1]} : vector<4x9xf32> to vector<4x1xf32>
    %279 = vector.broadcast %278 : vector<4x1xf32> to vector<4x256xf32>
    %280 = arith.mulf %277, %279 : vector<4x256xf32>
    %281 = arith.addf %273, %280 : vector<4x256xf32>
    %c240_i32_14 = arith.constant 240 : i32
    %282 = tpu.dynamic_rotate %230 by %c240_i32_14 dim 1 : vector<4x256xf32>, i32 -> vector<4x256xf32>
    %283 = vector.extract_strided_slice %1 {offsets = [7, 0], sizes = [1, 256], strides = [1, 1]} : vector<9x256xf32> to vector<1x256xf32>
    %284 = vector.broadcast %283 : vector<1x256xf32> to vector<4x256xf32>
    %285 = arith.mulf %282, %284 : vector<4x256xf32>
    %286 = vector.extract_strided_slice %9 {offsets = [0, 7], sizes = [4, 1], strides = [1, 1]} : vector<4x9xf32> to vector<4x1xf32>
    %287 = vector.broadcast %286 : vector<4x1xf32> to vector<4x256xf32>
    %288 = arith.mulf %285, %287 : vector<4x256xf32>
    %289 = arith.addf %281, %288 : vector<4x256xf32>
    %c239_i32_15 = arith.constant 239 : i32
    %290 = tpu.dynamic_rotate %230 by %c239_i32_15 dim 1 : vector<4x256xf32>, i32 -> vector<4x256xf32>
    %291 = vector.extract_strided_slice %1 {offsets = [8, 0], sizes = [1, 256], strides = [1, 1]} : vector<9x256xf32> to vector<1x256xf32>
    %292 = vector.broadcast %291 : vector<1x256xf32> to vector<4x256xf32>
    %293 = arith.mulf %290, %292 : vector<4x256xf32>
    %294 = vector.extract_strided_slice %9 {offsets = [0, 8], sizes = [4, 1], strides = [1, 1]} : vector<4x9xf32> to vector<4x1xf32>
    %295 = vector.broadcast %294 : vector<4x1xf32> to vector<4x256xf32>
    %296 = arith.mulf %293, %295 : vector<4x256xf32>
    %297 = arith.addf %289, %296 : vector<4x256xf32>
    %298 = vector.broadcast %11 : vector<4x1xf32> to vector<4x256xf32>
    %299 = arith.addf %297, %298 : vector<4x256xf32>
    %300 = vector.extract_strided_slice %230 {offsets = [0, 0], sizes = [2, 256], strides = [1, 1]} : vector<4x256xf32> to vector<2x256xf32>
    %301 = vector.extract_strided_slice %0 {offsets = [0, 0], sizes = [2, 256], strides = [1, 1]} : vector<8x256xf32> to vector<2x256xf32>
    %302 = arith.addf %300, %301 : vector<2x256xf32>
    %c0_16 = arith.constant 0 : index
    %c0_17 = arith.constant 0 : index
    %303 = vector.load %arg5[%c0_16, %c0_17] : memref<8x256xf32, #tpu.memory_space<vmem>>, vector<2x256xf32>
    tpu.vector_store %arg5[%c0_16, %c0_17], %302 {strides = array<i32>} : memref<8x256xf32, #tpu.memory_space<vmem>>, vector<2x256xf32>,
    %304 = vector.extract_strided_slice %299 {offsets = [0, 0], sizes = [2, 256], strides = [1, 1]} : vector<4x256xf32> to vector<2x256xf32>
    %305 = vector.extract_strided_slice %0 {offsets = [2, 0], sizes = [2, 256], strides = [1, 1]} : vector<8x256xf32> to vector<2x256xf32>
    %306 = arith.addf %304, %305 : vector<2x256xf32>
    %c2 = arith.constant 2 : index
    %c0_18 = arith.constant 0 : index
    %307 = vector.load %arg5[%c2, %c0_18] : memref<8x256xf32, #tpu.memory_space<vmem>>, vector<2x256xf32>
    tpu.vector_store %arg5[%c2, %c0_18], %306 {strides = array<i32>} : memref<8x256xf32, #tpu.memory_space<vmem>>, vector<2x256xf32>,
    %308 = vector.extract_strided_slice %230 {offsets = [2, 0], sizes = [2, 256], strides = [1, 1]} : vector<4x256xf32> to vector<2x256xf32>
    %309 = vector.extract_strided_slice %0 {offsets = [4, 0], sizes = [2, 256], strides = [1, 1]} : vector<8x256xf32> to vector<2x256xf32>
    %310 = arith.addf %308, %309 : vector<2x256xf32>
    %c4 = arith.constant 4 : index
    %c0_19 = arith.constant 0 : index
    %311 = vector.load %arg5[%c4, %c0_19] : memref<8x256xf32, #tpu.memory_space<vmem>>, vector<2x256xf32>
    tpu.vector_store %arg5[%c4, %c0_19], %310 {strides = array<i32>} : memref<8x256xf32, #tpu.memory_space<vmem>>, vector<2x256xf32>,
    %312 = vector.extract_strided_slice %299 {offsets = [2, 0], sizes = [2, 256], strides = [1, 1]} : vector<4x256xf32> to vector<2x256xf32>
    %313 = vector.extract_strided_slice %0 {offsets = [6, 0], sizes = [2, 256], strides = [1, 1]} : vector<8x256xf32> to vector<2x256xf32>
    %314 = arith.addf %312, %313 : vector<2x256xf32>
    %c6 = arith.constant 6 : index
    %c0_20 = arith.constant 0 : index
    %315 = vector.load %arg5[%c6, %c0_20] : memref<8x256xf32, #tpu.memory_space<vmem>>, vector<2x256xf32>
    tpu.vector_store %arg5[%c6, %c0_20], %314 {strides = array<i32>} : memref<8x256xf32, #tpu.memory_space<vmem>>, vector<2x256xf32>,
    return
  }
  func.func @transform_0(%arg0: i32) -> (i32, i32) {
    %c0_i32 = arith.constant 0 : i32
    %c0_i32_0 = arith.constant 0 : i32
    return %arg0, %c0_i32 : i32, i32
  }
  func.func @transform_1(%arg0: i32) -> (i32, i32) {
    %c0_i32 = arith.constant 0 : i32
    %c0_i32_0 = arith.constant 0 : i32
    %c0_i32_1 = arith.constant 0 : i32
    return %c0_i32, %c0_i32_0 : i32, i32
  }
  func.func @transform_2(%arg0: i32) -> (i32, i32) {
    %c0_i32 = arith.constant 0 : i32
    %c0_i32_0 = arith.constant 0 : i32
    %c0_i32_1 = arith.constant 0 : i32
    return %c0_i32, %c0_i32_0 : i32, i32
  }
  func.func @transform_3(%arg0: i32) -> (i32, i32) {
    %c0_i32 = arith.constant 0 : i32
    %c0_i32_0 = arith.constant 0 : i32
    %c0_i32_1 = arith.constant 0 : i32
    return %c0_i32, %c0_i32_0 : i32, i32
  }
  func.func @transform_4(%arg0: i32) -> (i32, i32) {
    %c0_i32 = arith.constant 0 : i32
    %c0_i32_0 = arith.constant 0 : i32
    return %arg0, %c0_i32 : i32, i32
  }
}

</mosaic_0001>

<llo_original>
// kernel: tpu_custom_call.1
$region0: #{tpu_custom_call.1}
  #allocation0 [shape = 'u32[]', space=smem, size = 0x4, offset = 0x4, fixed_abs, tag = 'smem constant byte address 0x4 - core index']
  #allocation1 [shape = 'u32[144,128]{1,0:T(1,128)}', space=vmem, size = 0x12000, scoped, tag = 'internal scratch']
  %s0 = inlined_call_operand.hbm [shape: f32[8,256], index: 0, kind: input, shape index: {}]
  %s1 = inlined_call_operand.hbm [shape: f32[9,256], index: 1, kind: input, shape index: {}]
  %s2 = inlined_call_operand.hbm [shape: f32[8,15], index: 2, kind: input, shape index: {}]
  %s3 = inlined_call_operand.vmem [shape: f32[4,19], index: 3, kind: input, shape index: {}]
  %s4 = inlined_call_operand.hbm [shape: f32[8,256], index: 4, kind: output, shape index: {}]
  %s5 = sld [smem:[#allocation0]]
  $region38: #{tpu_custom_call.1} parent=0
    _
  %s7 = ssub.s32 1, %s5
  %s8 = scalar_select 0, %s7, %s5
  $region1: #{tpu_custom_call.1} parent=0
    #allocation2 [shape = 'u8[8192]{0}', space=vmem, size = 0x2000, scoped, tag = 'input window, operand 0, single buffered']
    #allocation3 [shape = 's32[1]{0}', space=sflag, size = 0x4, scoped, tag = 'scoped memory for tpu_custom_call.1']
    #allocation4 [shape = 's32[1]{0}', space=sflag, size = 0x4, scoped, tag = 'scoped memory for tpu_custom_call.1']
    #allocation5 [shape = 'u8[16384]{0}', space=vmem, size = 0x4000, scoped, tag = 'input window, operand 1, single buffered']
    #allocation6 [shape = 's32[1]{0}', space=sflag, size = 0x4, scoped, tag = 'scoped memory for tpu_custom_call.1']
    #allocation7 [shape = 'u8[4096]{0}', space=vmem, size = 0x1000, scoped, tag = 'input window, operand 2, single buffered']
    #allocation8 [shape = 'u8[8192]{0}', space=vmem, size = 0x2000, scoped, tag = 'output window, operand 0, single buffered']
    %9 = vsyncpa [#allocation3], 0
    %10 = vsyncpa [#allocation6], 0
    %11 = vsyncpa [#allocation4], 0
    // Predicated region
    $region2: #{tpu_custom_call.1} parent=1 // pred_check
      _
    $region3: #{tpu_custom_call.1} parent=1 // pred_check_branch
      %13 = sbr.rel (0) target = $region5
    $region4: #{tpu_custom_call.1} parent=1 // pred_region
      %s15 = ssub.s32 256, 256
      %16 = vsyncadd [#allocation3], %s15
      %s18 = sshll.u32 [#allocation2], 4
      %s19 = int_to_ptr.vmem [resolvable:$true] %s18
      %21 = dma.hbm_to_vmem [thread:$0]  %s0, 256, %s19, [#allocation3]
    $region5: #{tpu_custom_call.1} parent=1 // pred_fallthru
      _
    // Predicated region
    $region6: #{tpu_custom_call.1} parent=1 // pred_check
      _
    $region7: #{tpu_custom_call.1} parent=1 // pred_check_branch
      %23 = sbr.rel (0) target = $region9
    $region8: #{tpu_custom_call.1} parent=1 // pred_region
      %s25 = ssub.s32 512, 512
      %26 = vsyncadd [#allocation6], %s25
      %s27 = sshll.u32 [#allocation5], 4
      %s28 = int_to_ptr.vmem [resolvable:$true] %s27
      %33 = dma.hbm_to_vmem [thread:$0]  %s1, 512, %s28, [#allocation6], 256, 256, 16
    $region9: #{tpu_custom_call.1} parent=1 // pred_fallthru
      _
    // Predicated region
    $region10: #{tpu_custom_call.1} parent=1 // pred_check
      _
    $region11: #{tpu_custom_call.1} parent=1 // pred_check_branch
      %35 = sbr.rel (0) target = $region13
    $region12: #{tpu_custom_call.1} parent=1 // pred_region
      %s37 = ssub.s32 128, 128
      %38 = vsyncadd [#allocation6], %s37
      %s40 = sshll.u32 [#allocation7], 4
      %s41 = int_to_ptr.vmem [resolvable:$true] %s40
      %43 = dma.hbm_to_vmem [thread:$0]  %s2, 128, %s41, [#allocation6]
    $region13: #{tpu_custom_call.1} parent=1 // pred_fallthru
      _
    // Predicated region
    $region14: #{tpu_custom_call.1} parent=1 // pred_check
      _
    $region15: #{tpu_custom_call.1} parent=1 // pred_check_branch
      %45 = sbr.rel (0) target = $region17
    $region16: #{tpu_custom_call.1} parent=1 // pred_region
      _
    $region17: #{tpu_custom_call.1} parent=1 // pred_fallthru
      _
    // Predicated region
    $region18: #{tpu_custom_call.1} parent=1 // pred_check
      _
    $region19: #{tpu_custom_call.1} parent=1 // pred_check_branch
      %47 = sbr.rel (0) target = $region21
    $region20: #{tpu_custom_call.1} parent=1 // pred_region
      %48 = dma.done [#allocation3], 256
    $region21: #{tpu_custom_call.1} parent=1 // pred_fallthru
      _
    // Predicated region
    $region22: #{tpu_custom_call.1} parent=1 // pred_check
      _
    $region23: #{tpu_custom_call.1} parent=1 // pred_check_branch
      %50 = sbr.rel (0) target = $region25
    $region24: #{tpu_custom_call.1} parent=1 // pred_region
      %51 = dma.done [#allocation6], 512
    $region25: #{tpu_custom_call.1} parent=1 // pred_fallthru
      _
    // Predicated region
    $region26: #{tpu_custom_call.1} parent=1 // pred_check
      _
    $region27: #{tpu_custom_call.1} parent=1 // pred_check_branch
      %53 = sbr.rel (0) target = $region29
    $region28: #{tpu_custom_call.1} parent=1 // pred_region
      %54 = dma.done [#allocation6], 128
    $region29: #{tpu_custom_call.1} parent=1 // pred_fallthru
      _
    %v55 = vld [vmem:[#allocation2] sm:$0xff]
    %v56 = vld [vmem:[#allocation2 + $0x8] sm:$0xff]
    %v57 = vld [vmem:[#allocation5] sm:$0xff]
    %v58 = vld [vmem:[#allocation5 + $0x8] sm:$0xff]
    %v59 = vld [vmem:[#allocation5 + $0x10] sm:$0x1]
    %v60 = vld [vmem:[#allocation5 + $0x18] sm:$0x1]
    %v61 = vld [vmem:[#allocation7] sm:$0xff]
    %v62 = vld [vmem:[%s3] sm:$0xf]
    %64 = vset.pattern.permute.xlu0 0
    %65 = vperm.xlu0 %64, %v61
    %v66 = vpop.permute.xlu0 %65
    %v68 = vlaneseq
    %v69 = vshrl.u32 %v68, 7
    %v70 = vsub.s32 0, %v69
    %v71 = vrot.slane %v55, %v70
    %v72 = vlaneseq
    %v73 = vshrl.u32 %v72, 7
    %v74 = vsub.s32 0, %v73
    %v75 = vrot.slane %v56, %v74
    %v76 = vmul.f32 %v66, %v71
    %v77 = vmul.f32 %v66, %v75
    %78 = vset.pattern.permute.xlu0 1
    %79 = vperm.xlu0 %78, %v61
    %v80 = vpop.permute.xlu0 %79
    %v82 = vlaneseq
    %v83 = vshrl.u32 %v82, 7
    %v84 = vsub.s32 1, %v83
    %v85 = vrot.slane %v55, %v84
    %v86 = vlaneseq
    %v87 = vshrl.u32 %v86, 7
    %v88 = vsub.s32 1, %v87
    %v89 = vrot.slane %v56, %v88
    %v90 = vmul.f32 %v80, %v85
    %v91 = vmul.f32 %v80, %v89
    %v92 = vadd.f32 %v76, %v90
    %v93 = vadd.f32 %v77, %v91
    %94 = vset.pattern.permute.xlu0 2
    %95 = vperm.xlu0 %94, %v61
    %v96 = vpop.permute.xlu0 %95
    %v98 = vlaneseq
    %v99 = vshrl.u32 %v98, 7
    %v100 = vsub.s32 2, %v99
    %v101 = vrot.slane %v55, %v100
    %v102 = vlaneseq
    %v103 = vshrl.u32 %v102, 7
    %v104 = vsub.s32 2, %v103
    %v105 = vrot.slane %v56, %v104
    %v106 = vmul.f32 %v96, %v101
    %v107 = vmul.f32 %v96, %v105
    %v108 = vadd.f32 %v92, %v106
    %v109 = vadd.f32 %v93, %v107
    %110 = vset.pattern.permute.xlu0 3
    %111 = vperm.xlu0 %110, %v61
    %v112 = vpop.permute.xlu0 %111
    %v114 = vlaneseq
    %v115 = vshrl.u32 %v114, 7
    %v116 = vsub.s32 3, %v115
    %v117 = vrot.slane %v55, %v116
    %v118 = vlaneseq
    %v119 = vshrl.u32 %v118, 7
    %v120 = vsub.s32 3, %v119
    %v121 = vrot.slane %v56, %v120
    %v122 = vmul.f32 %v112, %v117
    %v123 = vmul.f32 %v112, %v121
    %v124 = vadd.f32 %v108, %v122
    %v125 = vadd.f32 %v109, %v123
    %v126 = vlaneseq
    %v127 = vshrl.u32 %v126, 7
    %v128 = vsub.s32 4, %v127
    %v129 = vrot.slane %v55, %v128
    %v130 = vlaneseq
    %v131 = vshrl.u32 %v130, 7
    %v132 = vsub.s32 4, %v131
    %v133 = vrot.slane %v56, %v132
    %v134 = vmul.f32 %v66, %v129
    %v135 = vmul.f32 %v66, %v133
    %v136 = vlaneseq
    %v137 = vshrl.u32 %v136, 7
    %v138 = vsub.s32 5, %v137
    %v139 = vrot.slane %v55, %v138
    %v140 = vlaneseq
    %v141 = vshrl.u32 %v140, 7
    %v142 = vsub.s32 5, %v141
    %v143 = vrot.slane %v56, %v142
    %v144 = vmul.f32 %v80, %v139
    %v145 = vmul.f32 %v80, %v143
    %v146 = vadd.f32 %v134, %v144
    %v147 = vadd.f32 %v135, %v145
    %v148 = vlaneseq
    %v149 = vshrl.u32 %v148, 7
    %v150 = vsub.s32 6, %v149
    %v151 = vrot.slane %v55, %v150
    %v152 = vlaneseq
    %v153 = vshrl.u32 %v152, 7
    %v154 = vsub.s32 6, %v153
    %v155 = vrot.slane %v56, %v154
    %v156 = vmul.f32 %v96, %v151
    %v157 = vmul.f32 %v96, %v155
    %v158 = vadd.f32 %v146, %v156
    %v159 = vadd.f32 %v147, %v157
    %v160 = vlaneseq
    %v161 = vshrl.u32 %v160, 7
    %v162 = vsub.s32 7, %v161
    %v163 = vrot.slane %v55, %v162
    %v164 = vlaneseq
    %v165 = vshrl.u32 %v164, 7
    %v166 = vsub.s32 7, %v165
    %v167 = vrot.slane %v56, %v166
    %v168 = vmul.f32 %v112, %v163
    %v169 = vmul.f32 %v112, %v167
    %v170 = vadd.f32 %v158, %v168
    %v171 = vadd.f32 %v159, %v169
    %v174 = vrot.slane %v170, 4
    %v175 = vrot.slane %v171, 4
    %vm178 = vcmask 1043456
    %v179 = vsel %vm178, %v124, %v174
    %v180 = vsel %vm178, %v125, %v175
    %181 = vset.pattern.permute.xlu0 13
    %182 = vperm.xlu0 %181, %v61
    %v183 = vpop.permute.xlu0 %182
    %v185 = vadd.f32 %v179, %v183
    %v186 = vadd.f32 %v180, %v183
    %v187 = vmax.f32 %v185, 0.0
    %v188 = vmax.f32 %v186, 0.0
    %189 = vset.pattern.permute.xlu0 8
    %190 = vperm.xlu0 %189, %v61
    %v191 = vpop.permute.xlu0 %190
    %v193 = vmul.f32 %v187, %v191
    %v194 = vmul.f32 %v188, %v191
    %195 = vrot.lane.b32.xlu0 %v187, 17
    %v196 = vpop.permute.xlu0 %195
    %197 = vrot.lane.b32.xlu0 %v188, 17
    %v198 = vpop.permute.xlu0 %197
    %v199 = vlaneseq
    %v200 = vand.u32 %v199, 127
    %vm201 = vcmp.lt.s32.totalorder %v200, 17
    %v202 = vsel %vm201, %v196, %v198
    %v203 = vsel %vm201, %v198, %v196
    %v204 = vlaneseq
    %v205 = vshrl.u32 %v204, 7
    %v206 = vsub.s32 0, %v205
    %v207 = vrot.slane %v57, %v206
    %v208 = vlaneseq
    %v209 = vshrl.u32 %v208, 7
    %v210 = vsub.s32 0, %v209
    %v211 = vrot.slane %v58, %v210
    %v212 = vmul.f32 %v203, %v207
    %v213 = vmul.f32 %v202, %v211
    %214 = vset.pattern.permute.xlu0 4
    %215 = vperm.xlu0 %214, %v61
    %v216 = vpop.permute.xlu0 %215
    %v218 = vmul.f32 %v212, %v216
    %v219 = vmul.f32 %v213, %v216
    %v220 = vadd.f32 %v193, %v218
    %v221 = vadd.f32 %v194, %v219
    %222 = vrot.lane.b32.xlu0 %v187, 16
    %v223 = vpop.permute.xlu0 %222
    %224 = vrot.lane.b32.xlu0 %v188, 16
    %v225 = vpop.permute.xlu0 %224
    %vm226 = vcmp.lt.s32.totalorder %v200, 16
    %v227 = vsel %vm226, %v223, %v225
    %v228 = vsel %vm226, %v225, %v223
    %v229 = vlaneseq
    %v230 = vshrl.u32 %v229, 7
    %v231 = vsub.s32 1, %v230
    %v232 = vrot.slane %v57, %v231
    %v233 = vlaneseq
    %v234 = vshrl.u32 %v233, 7
    %v235 = vsub.s32 1, %v234
    %v236 = vrot.slane %v58, %v235
    %v237 = vmul.f32 %v228, %v232
    %v238 = vmul.f32 %v227, %v236
    %239 = vset.pattern.permute.xlu0 5
    %240 = vperm.xlu0 %239, %v61
    %v241 = vpop.permute.xlu0 %240
    %v243 = vmul.f32 %v237, %v241
    %v244 = vmul.f32 %v238, %v241
    %v245 = vadd.f32 %v220, %v243
    %v246 = vadd.f32 %v221, %v244
    %247 = vrot.lane.b32.xlu0 %v187, 15
    %v248 = vpop.permute.xlu0 %247
    %249 = vrot.lane.b32.xlu0 %v188, 15
    %v250 = vpop.permute.xlu0 %249
    %vm251 = vcmp.lt.s32.totalorder %v200, 15
    %v252 = vsel %vm251, %v248, %v250
    %v253 = vsel %vm251, %v250, %v248
    %v254 = vlaneseq
    %v255 = vshrl.u32 %v254, 7
    %v256 = vsub.s32 2, %v255
    %v257 = vrot.slane %v57, %v256
    %v258 = vlaneseq
    %v259 = vshrl.u32 %v258, 7
    %v260 = vsub.s32 2, %v259
    %v261 = vrot.slane %v58, %v260
    %v262 = vmul.f32 %v253, %v257
    %v263 = vmul.f32 %v252, %v261
    %264 = vset.pattern.permute.xlu0 6
    %265 = vperm.xlu0 %264, %v61
    %v266 = vpop.permute.xlu0 %265
    %v268 = vmul.f32 %v262, %v266
    %v269 = vmul.f32 %v263, %v266
    %v270 = vadd.f32 %v245, %v268
    %v271 = vadd.f32 %v246, %v269
    %272 = vrot.lane.b32.xlu0 %v187, 1
    %v273 = vpop.permute.xlu0 %272
    %274 = vrot.lane.b32.xlu0 %v188, 1
    %v275 = vpop.permute.xlu0 %274
    %vm276 = vcmp.lt.s32.totalorder %v200, 1
    %v277 = vsel %vm276, %v273, %v275
    %v278 = vsel %vm276, %v275, %v273
    %v279 = vlaneseq
    %v280 = vshrl.u32 %v279, 7
    %v281 = vsub.s32 3, %v280
    %v282 = vrot.slane %v57, %v281
    %v283 = vlaneseq
    %v284 = vshrl.u32 %v283, 7
    %v285 = vsub.s32 3, %v284
    %v286 = vrot.slane %v58, %v285
    %v287 = vmul.f32 %v278, %v282
    %v288 = vmul.f32 %v277, %v286
    %289 = vset.pattern.permute.xlu0 7
    %290 = vperm.xlu0 %289, %v61
    %v291 = vpop.permute.xlu0 %290
    %v293 = vmul.f32 %v287, %v291
    %v294 = vmul.f32 %v288, %v291
    %v295 = vadd.f32 %v270, %v293
    %v296 = vadd.f32 %v271, %v294
    %297 = vrot.lane.b32.xlu0 %v187, 127
    %v298 = vpop.permute.xlu0 %297
    %299 = vrot.lane.b32.xlu0 %v188, 127
    %v300 = vpop.permute.xlu0 %299
    %vm301 = vcmp.lt.s32.totalorder %v200, 127
    %v302 = vsel %vm301, %v298, %v300
    %v303 = vsel %vm301, %v300, %v298
    %v304 = vlaneseq
    %v305 = vshrl.u32 %v304, 7
    %v306 = vsub.s32 5, %v305
    %v307 = vrot.slane %v57, %v306
    %v308 = vlaneseq
    %v309 = vshrl.u32 %v308, 7
    %v310 = vsub.s32 5, %v309
    %v311 = vrot.slane %v58, %v310
    %v312 = vmul.f32 %v302, %v307
    %v313 = vmul.f32 %v303, %v311
    %314 = vset.pattern.permute.xlu0 9
    %315 = vperm.xlu0 %314, %v61
    %v316 = vpop.permute.xlu0 %315
    %v318 = vmul.f32 %v312, %v316
    %v319 = vmul.f32 %v313, %v316
    %v320 = vadd.f32 %v295, %v318
    %v321 = vadd.f32 %v296, %v319
    %322 = vrot.lane.b32.xlu0 %v187, 113
    %v323 = vpop.permute.xlu0 %322
    %324 = vrot.lane.b32.xlu0 %v188, 113
    %v325 = vpop.permute.xlu0 %324
    %vm326 = vcmp.lt.s32.totalorder %v200, 113
    %v327 = vsel %vm326, %v323, %v325
    %v328 = vsel %vm326, %v325, %v323
    %v329 = vlaneseq
    %v330 = vshrl.u32 %v329, 7
    %v331 = vsub.s32 6, %v330
    %v332 = vrot.slane %v57, %v331
    %v333 = vlaneseq
    %v334 = vshrl.u32 %v333, 7
    %v335 = vsub.s32 6, %v334
    %v336 = vrot.slane %v58, %v335
    %v337 = vmul.f32 %v327, %v332
    %v338 = vmul.f32 %v328, %v336
    %339 = vset.pattern.permute.xlu0 10
    %340 = vperm.xlu0 %339, %v61
    %v341 = vpop.permute.xlu0 %340
    %v343 = vmul.f32 %v337, %v341
    %v344 = vmul.f32 %v338, %v341
    %v345 = vadd.f32 %v320, %v343
    %v346 = vadd.f32 %v321, %v344
    %347 = vrot.lane.b32.xlu0 %v187, 112
    %v348 = vpop.permute.xlu0 %347
    %349 = vrot.lane.b32.xlu0 %v188, 112
    %v350 = vpop.permute.xlu0 %349
    %vm351 = vcmp.lt.s32.totalorder %v200, 112
    %v352 = vsel %vm351, %v348, %v350
    %v353 = vsel %vm351, %v350, %v348
    %v354 = vlaneseq
    %v355 = vshrl.u32 %v354, 7
    %v356 = vsub.s32 7, %v355
    %v357 = vrot.slane %v57, %v356
    %v358 = vlaneseq
    %v359 = vshrl.u32 %v358, 7
    %v360 = vsub.s32 7, %v359
    %v361 = vrot.slane %v58, %v360
    %v362 = vmul.f32 %v352, %v357
    %v363 = vmul.f32 %v353, %v361
    %364 = vset.pattern.permute.xlu0 11
    %365 = vperm.xlu0 %364, %v61
    %v366 = vpop.permute.xlu0 %365
    %v368 = vmul.f32 %v362, %v366
    %v369 = vmul.f32 %v363, %v366
    %v370 = vadd.f32 %v345, %v368
    %v371 = vadd.f32 %v346, %v369
    %372 = vrot.lane.b32.xlu0 %v187, 111
    %v373 = vpop.permute.xlu0 %372
    %374 = vrot.lane.b32.xlu0 %v188, 111
    %v375 = vpop.permute.xlu0 %374
    %vm376 = vcmp.lt.s32.totalorder %v200, 111
    %v377 = vsel %vm376, %v373, %v375
    %v378 = vsel %vm376, %v375, %v373
    %v379 = vlaneseq
    %v380 = vshrl.u32 %v379, 7
    %v381 = vsub.s32 0, %v380
    %v382 = vrot.slane %v59, %v381
    %v383 = vlaneseq
    %v384 = vshrl.u32 %v383, 7
    %v385 = vsub.s32 0, %v384
    %v386 = vrot.slane %v60, %v385
    %v387 = vmul.f32 %v377, %v382
    %v388 = vmul.f32 %v378, %v386
    %389 = vset.pattern.permute.xlu0 12
    %390 = vperm.xlu0 %389, %v61
    %v391 = vpop.permute.xlu0 %390
    %v393 = vmul.f32 %v387, %v391
    %v394 = vmul.f32 %v388, %v391
    %v395 = vadd.f32 %v370, %v393
    %v396 = vadd.f32 %v371, %v394
    %397 = vset.pattern.permute.xlu0 14
    %398 = vperm.xlu0 %397, %v61
    %v399 = vpop.permute.xlu0 %398
    %v401 = vadd.f32 %v395, %v399
    %v402 = vadd.f32 %v396, %v399
    %v403 = vmax.f32 %v401, 0.0
    %v404 = vmax.f32 %v402, 0.0
    %406 = vset.pattern.permute.xlu0 0
    %407 = vperm.xlu0 %406, %v62
    %v408 = vpop.permute.xlu0 %407
    %v410 = vlaneseq
    %v411 = vshrl.u32 %v410, 7
    %v412 = vsub.s32 0, %v411
    %v413 = vrot.slane %v187, %v412
    %v414 = vlaneseq
    %v415 = vshrl.u32 %v414, 7
    %v416 = vsub.s32 0, %v415
    %v417 = vrot.slane %v188, %v416
    %v418 = vmul.f32 %v408, %v413
    %v419 = vmul.f32 %v408, %v417
    %420 = vset.pattern.permute.xlu0 1
    %421 = vperm.xlu0 %420, %v62
    %v422 = vpop.permute.xlu0 %421
    %v424 = vlaneseq
    %v425 = vshrl.u32 %v424, 7
    %v426 = vsub.s32 1, %v425
    %v427 = vrot.slane %v187, %v426
    %v428 = vlaneseq
    %v429 = vshrl.u32 %v428, 7
    %v430 = vsub.s32 1, %v429
    %v431 = vrot.slane %v188, %v430
    %v432 = vmul.f32 %v422, %v427
    %v433 = vmul.f32 %v422, %v431
    %v434 = vadd.f32 %v418, %v432
    %v435 = vadd.f32 %v419, %v433
    %436 = vset.pattern.permute.xlu0 2
    %437 = vperm.xlu0 %436, %v62
    %v438 = vpop.permute.xlu0 %437
    %v440 = vlaneseq
    %v441 = vshrl.u32 %v440, 7
    %v442 = vsub.s32 2, %v441
    %v443 = vrot.slane %v187, %v442
    %v444 = vlaneseq
    %v445 = vshrl.u32 %v444, 7
    %v446 = vsub.s32 2, %v445
    %v447 = vrot.slane %v188, %v446
    %v448 = vmul.f32 %v438, %v443
    %v449 = vmul.f32 %v438, %v447
    %v450 = vadd.f32 %v434, %v448
    %v451 = vadd.f32 %v435, %v449
    %452 = vset.pattern.permute.xlu0 3
    %453 = vperm.xlu0 %452, %v62
    %v454 = vpop.permute.xlu0 %453
    %v456 = vlaneseq
    %v457 = vshrl.u32 %v456, 7
    %v458 = vsub.s32 3, %v457
    %v459 = vrot.slane %v187, %v458
    %v460 = vlaneseq
    %v461 = vshrl.u32 %v460, 7
    %v462 = vsub.s32 3, %v461
    %v463 = vrot.slane %v188, %v462
    %v464 = vmul.f32 %v454, %v459
    %v465 = vmul.f32 %v454, %v463
    %v466 = vadd.f32 %v450, %v464
    %v467 = vadd.f32 %v451, %v465
    %468 = vset.pattern.permute.xlu0 4
    %469 = vperm.xlu0 %468, %v62
    %v470 = vpop.permute.xlu0 %469
    %v472 = vlaneseq
    %v473 = vshrl.u32 %v472, 7
    %v474 = vsub.s32 0, %v473
    %v475 = vrot.slane %v403, %v474
    %v476 = vlaneseq
    %v477 = vshrl.u32 %v476, 7
    %v478 = vsub.s32 0, %v477
    %v479 = vrot.slane %v404, %v478
    %v480 = vmul.f32 %v470, %v475
    %v481 = vmul.f32 %v470, %v479
    %v482 = vadd.f32 %v466, %v480
    %v483 = vadd.f32 %v467, %v481
    %484 = vset.pattern.permute.xlu0 5
    %485 = vperm.xlu0 %484, %v62
    %v486 = vpop.permute.xlu0 %485
    %v488 = vlaneseq
    %v489 = vshrl.u32 %v488, 7
    %v490 = vsub.s32 1, %v489
    %v491 = vrot.slane %v403, %v490
    %v492 = vlaneseq
    %v493 = vshrl.u32 %v492, 7
    %v494 = vsub.s32 1, %v493
    %v495 = vrot.slane %v404, %v494
    %v496 = vmul.f32 %v486, %v491
    %v497 = vmul.f32 %v486, %v495
    %v498 = vadd.f32 %v482, %v496
    %v499 = vadd.f32 %v483, %v497
    %500 = vset.pattern.permute.xlu0 6
    %501 = vperm.xlu0 %500, %v62
    %v502 = vpop.permute.xlu0 %501
    %v504 = vlaneseq
    %v505 = vshrl.u32 %v504, 7
    %v506 = vsub.s32 2, %v505
    %v507 = vrot.slane %v403, %v506
    %v508 = vlaneseq
    %v509 = vshrl.u32 %v508, 7
    %v510 = vsub.s32 2, %v509
    %v511 = vrot.slane %v404, %v510
    %v512 = vmul.f32 %v502, %v507
    %v513 = vmul.f32 %v502, %v511
    %v514 = vadd.f32 %v498, %v512
    %v515 = vadd.f32 %v499, %v513
    %516 = vset.pattern.permute.xlu0 7
    %517 = vperm.xlu0 %516, %v62
    %v518 = vpop.permute.xlu0 %517
    %v520 = vlaneseq
    %v521 = vshrl.u32 %v520, 7
    %v522 = vsub.s32 3, %v521
    %v523 = vrot.slane %v403, %v522
    %v524 = vlaneseq
    %v525 = vshrl.u32 %v524, 7
    %v526 = vsub.s32 3, %v525
    %v527 = vrot.slane %v404, %v526
    %v528 = vmul.f32 %v518, %v523
    %v529 = vmul.f32 %v518, %v527
    %v530 = vadd.f32 %v514, %v528
    %v531 = vadd.f32 %v515, %v529
    %v532 = vlaneseq
    %v533 = vshrl.u32 %v532, 7
    %v534 = vsub.s32 4, %v533
    %v535 = vrot.slane %v187, %v534
    %v536 = vlaneseq
    %v537 = vshrl.u32 %v536, 7
    %v538 = vsub.s32 4, %v537
    %v539 = vrot.slane %v188, %v538
    %v540 = vmul.f32 %v408, %v535
    %v541 = vmul.f32 %v408, %v539
    %v542 = vlaneseq
    %v543 = vshrl.u32 %v542, 7
    %v544 = vsub.s32 5, %v543
    %v545 = vrot.slane %v187, %v544
    %v546 = vlaneseq
    %v547 = vshrl.u32 %v546, 7
    %v548 = vsub.s32 5, %v547
    %v549 = vrot.slane %v188, %v548
    %v550 = vmul.f32 %v422, %v545
    %v551 = vmul.f32 %v422, %v549
    %v552 = vadd.f32 %v540, %v550
    %v553 = vadd.f32 %v541, %v551
    %v554 = vlaneseq
    %v555 = vshrl.u32 %v554, 7
    %v556 = vsub.s32 6, %v555
    %v557 = vrot.slane %v187, %v556
    %v558 = vlaneseq
    %v559 = vshrl.u32 %v558, 7
    %v560 = vsub.s32 6, %v559
    %v561 = vrot.slane %v188, %v560
    %v562 = vmul.f32 %v438, %v557
    %v563 = vmul.f32 %v438, %v561
    %v564 = vadd.f32 %v552, %v562
    %v565 = vadd.f32 %v553, %v563
    %v566 = vlaneseq
    %v567 = vshrl.u32 %v566, 7
    %v568 = vsub.s32 7, %v567
    %v569 = vrot.slane %v187, %v568
    %v570 = vlaneseq
    %v571 = vshrl.u32 %v570, 7
    %v572 = vsub.s32 7, %v571
    %v573 = vrot.slane %v188, %v572
    %v574 = vmul.f32 %v454, %v569
    %v575 = vmul.f32 %v454, %v573
    %v576 = vadd.f32 %v564, %v574
    %v577 = vadd.f32 %v565, %v575
    %v578 = vlaneseq
    %v579 = vshrl.u32 %v578, 7
    %v580 = vsub.s32 4, %v579
    %v581 = vrot.slane %v403, %v580
    %v582 = vlaneseq
    %v583 = vshrl.u32 %v582, 7
    %v584 = vsub.s32 4, %v583
    %v585 = vrot.slane %v404, %v584
    %v586 = vmul.f32 %v470, %v581
    %v587 = vmul.f32 %v470, %v585
    %v588 = vadd.f32 %v576, %v586
    %v589 = vadd.f32 %v577, %v587
    %v590 = vlaneseq
    %v591 = vshrl.u32 %v590, 7
    %v592 = vsub.s32 5, %v591
    %v593 = vrot.slane %v403, %v592
    %v594 = vlaneseq
    %v595 = vshrl.u32 %v594, 7
    %v596 = vsub.s32 5, %v595
    %v597 = vrot.slane %v404, %v596
    %v598 = vmul.f32 %v486, %v593
    %v599 = vmul.f32 %v486, %v597
    %v600 = vadd.f32 %v588, %v598
    %v601 = vadd.f32 %v589, %v599
    %v602 = vlaneseq
    %v603 = vshrl.u32 %v602, 7
    %v604 = vsub.s32 6, %v603
    %v605 = vrot.slane %v403, %v604
    %v606 = vlaneseq
    %v607 = vshrl.u32 %v606, 7
    %v608 = vsub.s32 6, %v607
    %v609 = vrot.slane %v404, %v608
    %v610 = vmul.f32 %v502, %v605
    %v611 = vmul.f32 %v502, %v609
    %v612 = vadd.f32 %v600, %v610
    %v613 = vadd.f32 %v601, %v611
    %v614 = vlaneseq
    %v615 = vshrl.u32 %v614, 7
    %v616 = vsub.s32 7, %v615
    %v617 = vrot.slane %v403, %v616
    %v618 = vlaneseq
    %v619 = vshrl.u32 %v618, 7
    %v620 = vsub.s32 7, %v619
    %v621 = vrot.slane %v404, %v620
    %v622 = vmul.f32 %v518, %v617
    %v623 = vmul.f32 %v518, %v621
    %v624 = vadd.f32 %v612, %v622
    %v625 = vadd.f32 %v613, %v623
    %v628 = vrot.slane %v624, 6
    %v629 = vrot.slane %v625, 6
    %vm632 = vcmask 1041408
    %v633 = vsel %vm632, %v530, %v628
    %v634 = vsel %vm632, %v531, %v629
    %635 = vset.pattern.permute.xlu0 17
    %636 = vperm.xlu0 %635, %v62
    %v637 = vpop.permute.xlu0 %636
    %v639 = vadd.f32 %v633, %v637
    %v640 = vadd.f32 %v634, %v637
    %641 = vset.pattern.permute.xlu0 12
    %642 = vperm.xlu0 %641, %v62
    %v643 = vpop.permute.xlu0 %642
    %v645 = vmul.f32 %v639, %v643
    %v646 = vmul.f32 %v640, %v643
    %647 = vrot.lane.b32.xlu0 %v639, 17
    %v648 = vpop.permute.xlu0 %647
    %649 = vrot.lane.b32.xlu0 %v640, 17
    %v650 = vpop.permute.xlu0 %649
    %v651 = vsel %vm201, %v648, %v650
    %v652 = vsel %vm201, %v650, %v648
    %v653 = vmul.f32 %v652, %v207
    %v654 = vmul.f32 %v651, %v211
    %655 = vset.pattern.permute.xlu0 8
    %656 = vperm.xlu0 %655, %v62
    %v657 = vpop.permute.xlu0 %656
    %v659 = vmul.f32 %v653, %v657
    %v660 = vmul.f32 %v654, %v657
    %v661 = vadd.f32 %v645, %v659
    %v662 = vadd.f32 %v646, %v660
    %663 = vrot.lane.b32.xlu0 %v639, 16
    %v664 = vpop.permute.xlu0 %663
    %665 = vrot.lane.b32.xlu0 %v640, 16
    %v666 = vpop.permute.xlu0 %665
    %v667 = vsel %vm226, %v664, %v666
    %v668 = vsel %vm226, %v666, %v664
    %v669 = vmul.f32 %v668, %v232
    %v670 = vmul.f32 %v667, %v236
    %671 = vset.pattern.permute.xlu0 9
    %672 = vperm.xlu0 %671, %v62
    %v673 = vpop.permute.xlu0 %672
    %v675 = vmul.f32 %v669, %v673
    %v676 = vmul.f32 %v670, %v673
    %v677 = vadd.f32 %v661, %v675
    %v678 = vadd.f32 %v662, %v676
    %679 = vrot.lane.b32.xlu0 %v639, 15
    %v680 = vpop.permute.xlu0 %679
    %681 = vrot.lane.b32.xlu0 %v640, 15
    %v682 = vpop.permute.xlu0 %681
    %v683 = vsel %vm251, %v680, %v682
    %v684 = vsel %vm251, %v682, %v680
    %v685 = vmul.f32 %v684, %v257
    %v686 = vmul.f32 %v683, %v261
    %687 = vset.pattern.permute.xlu0 10
    %688 = vperm.xlu0 %687, %v62
    %v689 = vpop.permute.xlu0 %688
    %v691 = vmul.f32 %v685, %v689
    %v692 = vmul.f32 %v686, %v689
    %v693 = vadd.f32 %v677, %v691
    %v694 = vadd.f32 %v678, %v692
    %695 = vrot.lane.b32.xlu0 %v639, 1
    %v696 = vpop.permute.xlu0 %695
    %697 = vrot.lane.b32.xlu0 %v640, 1
    %v698 = vpop.permute.xlu0 %697
    %v699 = vsel %vm276, %v696, %v698
    %v700 = vsel %vm276, %v698, %v696
    %v701 = vmul.f32 %v700, %v282
    %v702 = vmul.f32 %v699, %v286
    %703 = vset.pattern.permute.xlu0 11
    %704 = vperm.xlu0 %703, %v62
    %v705 = vpop.permute.xlu0 %704
    %v707 = vmul.f32 %v701, %v705
    %v708 = vmul.f32 %v702, %v705
    %v709 = vadd.f32 %v693, %v707
    %v710 = vadd.f32 %v694, %v708
    %711 = vrot.lane.b32.xlu0 %v639, 127
    %v712 = vpop.permute.xlu0 %711
    %713 = vrot.lane.b32.xlu0 %v640, 127
    %v714 = vpop.permute.xlu0 %713
    %v715 = vsel %vm301, %v712, %v714
    %v716 = vsel %vm301, %v714, %v712
    %v717 = vmul.f32 %v715, %v307
    %v718 = vmul.f32 %v716, %v311
    %719 = vset.pattern.permute.xlu0 13
    %720 = vperm.xlu0 %719, %v62
    %v721 = vpop.permute.xlu0 %720
    %v723 = vmul.f32 %v717, %v721
    %v724 = vmul.f32 %v718, %v721
    %v725 = vadd.f32 %v709, %v723
    %v726 = vadd.f32 %v710, %v724
    %727 = vrot.lane.b32.xlu0 %v639, 113
    %v728 = vpop.permute.xlu0 %727
    %729 = vrot.lane.b32.xlu0 %v640, 113
    %v730 = vpop.permute.xlu0 %729
    %v731 = vsel %vm326, %v728, %v730
    %v732 = vsel %vm326, %v730, %v728
    %v733 = vmul.f32 %v731, %v332
    %v734 = vmul.f32 %v732, %v336
    %735 = vset.pattern.permute.xlu0 14
    %736 = vperm.xlu0 %735, %v62
    %v737 = vpop.permute.xlu0 %736
    %v739 = vmul.f32 %v733, %v737
    %v740 = vmul.f32 %v734, %v737
    %v741 = vadd.f32 %v725, %v739
    %v742 = vadd.f32 %v726, %v740
    %743 = vrot.lane.b32.xlu0 %v639, 112
    %v744 = vpop.permute.xlu0 %743
    %745 = vrot.lane.b32.xlu0 %v640, 112
    %v746 = vpop.permute.xlu0 %745
    %v747 = vsel %vm351, %v744, %v746
    %v748 = vsel %vm351, %v746, %v744
    %v749 = vmul.f32 %v747, %v357
    %v750 = vmul.f32 %v748, %v361
    %751 = vset.pattern.permute.xlu0 15
    %752 = vperm.xlu0 %751, %v62
    %v753 = vpop.permute.xlu0 %752
    %v755 = vmul.f32 %v749, %v753
    %v756 = vmul.f32 %v750, %v753
    %v757 = vadd.f32 %v741, %v755
    %v758 = vadd.f32 %v742, %v756
    %759 = vrot.lane.b32.xlu0 %v639, 111
    %v760 = vpop.permute.xlu0 %759
    %761 = vrot.lane.b32.xlu0 %v640, 111
    %v762 = vpop.permute.xlu0 %761
    %v763 = vsel %vm376, %v760, %v762
    %v764 = vsel %vm376, %v762, %v760
    %v765 = vmul.f32 %v763, %v382
    %v766 = vmul.f32 %v764, %v386
    %767 = vset.pattern.permute.xlu0 16
    %768 = vperm.xlu0 %767, %v62
    %v769 = vpop.permute.xlu0 %768
    %v771 = vmul.f32 %v765, %v769
    %v772 = vmul.f32 %v766, %v769
    %v773 = vadd.f32 %v757, %v771
    %v774 = vadd.f32 %v758, %v772
    %775 = vset.pattern.permute.xlu0 18
    %776 = vperm.xlu0 %775, %v62
    %v777 = vpop.permute.xlu0 %776
    %v779 = vadd.f32 %v773, %v777
    %v780 = vadd.f32 %v774, %v777
    %v781 = vadd.f32 %v639, %v55
    %v782 = vadd.f32 %v640, %v56
    %783 = vst [vmem:[#allocation8] sm:$0x3] %v781
    %784 = vst [vmem:[#allocation8 + $0x8] sm:$0x3] %v782
    %v787 = vrot.slane %v55, 2
    %v788 = vrot.slane %v56, 2
    %v791 = vadd.f32 %v779, %v787
    %v792 = vadd.f32 %v780, %v788
    %v795 = vrot.slane %v791, 6
    %v796 = vrot.slane %v792, 6
    %799 = vst [vmem:[#allocation8] sm:$0xc] %v795
    %800 = vst [vmem:[#allocation8 + $0x8] sm:$0xc] %v796
    %v801 = vadd.f32 %v639, %v787
    %v802 = vadd.f32 %v640, %v788
    %v805 = vrot.slane %v801, 6
    %v806 = vrot.slane %v802, 6
    %809 = vst [vmem:[#allocation8] sm:$0x30] %v805
    %810 = vst [vmem:[#allocation8 + $0x8] sm:$0x30] %v806
    %v811 = vrot.slane %v55, 4
    %v812 = vrot.slane %v56, 4
    %v815 = vadd.f32 %v779, %v811
    %v816 = vadd.f32 %v780, %v812
    %v819 = vrot.slane %v815, 4
    %v820 = vrot.slane %v816, 4
    %823 = vst [vmem:[#allocation8] sm:$0xc0] %v819
    %824 = vst [vmem:[#allocation8 + $0x8] sm:$0xc0] %v820
    // Predicated region
    $region30: #{tpu_custom_call.1} parent=1 // pred_check
      _
    $region31: #{tpu_custom_call.1} parent=1 // pred_check_branch
      %826 = sbr.rel (0) target = $region33
    $region32: #{tpu_custom_call.1} parent=1 // pred_region
      %s828 = ssub.s32 256, 256
      %829 = vsyncadd [#allocation4], %s828
      %s831 = sshll.u32 [#allocation8], 4
      %s832 = int_to_ptr.vmem [resolvable:$true] %s831
      %834 = dma.vmem_to_hbm [thread:$0]  %s832, 256, %s4, [#allocation4]
    $region33: #{tpu_custom_call.1} parent=1 // pred_fallthru
      _
    // Predicated region
    $region34: #{tpu_custom_call.1} parent=1 // pred_check
      _
    $region35: #{tpu_custom_call.1} parent=1 // pred_check_branch
      %836 = sbr.rel (0) target = $region37
    $region36: #{tpu_custom_call.1} parent=1 // pred_region
      %837 = dma.done [#allocation4], 256
    $region37: #{tpu_custom_call.1} parent=1 // pred_fallthru
      _
    %838 = vsyncpa [#allocation3], 1
    %839 = vsyncpa [#allocation6], 1
    %840 = vsyncpa [#allocation4], 1

</llo_original>
